<compile_context>
chip_gen: v7x
topology: tpu7x:2x2x1
jax: 0.10.0
libtpu: 0.0.40
codegen_flags: <defaults>
</compile_context>

<pallas_src>
import functools

import jax
import jax.numpy as jnp
from jax.experimental import pallas as pl
from jax.experimental.pallas import tpu as pltpu

EPS = 1e-5
_MIB = 1024 * 1024


def _tpu_hw_params():
    """(vmem_capacity_bytes, num_tensorcores) with conservative fallbacks."""
    vmem_bytes = 128 * _MIB
    n_cores = None
    try:
        info = pltpu.get_tpu_info()
    except Exception:
        info = None
    if info is not None:
        v = getattr(info, "vmem_capacity_bytes", None)
        if v is not None:
            try:
                v = int(v)
                if v > 0:
                    vmem_bytes = v
            except (TypeError, ValueError):
                pass
        for attr in ("num_tensorcores", "tensorcore_count", "num_cores", "core_count"):
            nc = getattr(info, attr, None)
            if nc is None:
                continue
            try:
                nc = int(nc)
            except (TypeError, ValueError):
                continue
            if nc >= 1:
                n_cores = nc
                break
    if n_cores is None:
        # Heuristic: v7x exposes 64 MiB VMEM per TC and has 2 TCs/chip;
        # v5e/v6e have 128 MiB VMEM and a single TC.
        n_cores = 2 if vmem_bytes <= 64 * _MIB else 1
    return vmem_bytes, n_cores


def _cfpn_loss_kernel(inp_ref, tgt_ref, pw_ref, nw_ref, out_ref,
                      s0_ref, s1_ref, *,
                      version, batch, tile_rows, blocks_per_core, acc_rows,
                      binary_targets, needs_mask):
    """Batch-tiled weighted-BCE reduction.

    Grid: (core_split "parallel", batch_tile "arbitrary").
    inp_ref, tgt_ref : (TB, C)      VMEM tile of the current batch slab (native dtype)
    pw_ref, nw_ref   : (1, C)       f32 class weights
    out_ref          : (1, 1, C)    f32 per-split output row (resident over the reduction)
    s0_ref, s1_ref   : (acc_rows,C) f32 VMEM accumulators (partial sums over batch)
    """
    c = pl.program_id(0)          # core-split index
    g = pl.program_id(1)          # batch-tile index within this split

    @pl.when(g == 0)
    def _init():
        s0_ref[...] = jnp.zeros_like(s0_ref)
        s1_ref[...] = jnp.zeros_like(s1_ref)

    x = inp_ref[...].astype(jnp.float32)   # widen in VMEM, not in HBM
    t = tgt_ref[...].astype(jnp.float32)

    # Per-element terms; their batch-sums go into s0 (and s1 for 'stand').
    if version == "stand":
        if binary_targets:
            tb_mask = t > 0.0
            logv = jnp.log(jnp.where(tb_mask, x, 1.0 - x) + EPS)   # single EUP log/elem
            terms = (jnp.where(tb_mask, logv, 0.0),                # pos log-sum
                     jnp.where(tb_mask, 0.0, logv))                # neg log-sum
        else:
            terms = (t * jnp.log(x + EPS),
                     (1.0 - t) * jnp.log(1.0 - x + EPS))
    elif version == "ablationLoss":
        if binary_targets:
            tb_mask = t > 0.0
            terms = (jnp.log(jnp.where(tb_mask, x, 1.0 - x) + EPS),)
        else:
            terms = (t * jnp.log(x + EPS) + (1.0 - t) * jnp.log(1.0 - x + EPS),)
    elif version == "Focal_Loss":
        if binary_targets:
            tb_mask = t > 0.0
            logv = jnp.log(jnp.where(tb_mask, x, 1.0 - x) + EPS)
            coef = jnp.where(tb_mask, (1.0 - x) * (1.0 - x), x * x)  # gamma == 2
            terms = (coef * logv,)
        else:
            terms = ((1.0 - t) * (x * x) * jnp.log(1.0 - x + EPS)
                     + t * ((1.0 - x) * (1.0 - x)) * jnp.log(x + EPS),)
    else:
        raise ValueError(f"unknown version {version}")

    accs = (s0_ref, s1_ref)[:len(terms)]

    def _rsum(v):
        # (tile_rows, C) -> (acc_rows, C). acc_rows == 8: pure vreg adds
        # (sublane collapse deferred to finalize); acc_rows == 1: XLU reduce.
        if acc_rows == 1:
            return jnp.sum(v, axis=0, keepdims=True)
        return jnp.sum(v.reshape(tile_rows // acc_rows, acc_rows, v.shape[-1]), axis=0)

    def _acc(bsum):
        for acc, term in zip(accs, terms):
            acc[...] += bsum(term)

    if needs_mask:
        # Masking runs only on steps whose tile overhangs the batch (partial
        # last tile of a split, or a duplicated pad step when the block count
        # does not divide evenly across core splits). Full tiles are unmasked.
        blk = c * blocks_per_core + g          # unclamped logical block index
        rem = batch - blk * tile_rows          # valid rows of this block

        @pl.when(rem >= tile_rows)
        def _full():
            _acc(_rsum)

        @pl.when(rem < tile_rows)
        def _partial():
            row = jax.lax.broadcasted_iota(jnp.int32, (tile_rows, 1), 0)
            valid = row < rem                  # rem <= 0 -> everything masked out
            _acc(lambda v: _rsum(jnp.where(valid, v, 0.0)))
    else:
        _acc(_rsum)

    @pl.when(g == pl.num_programs(1) - 1)
    def _finalize():
        scale = -1.0 / float(batch)            # fold negation and /B together

        def collapse(ref):
            s = ref[...]
            return jnp.sum(s, axis=0, keepdims=True) if acc_rows > 1 else s

        if version == "stand":
            res = (pw_ref[...] * collapse(s0_ref)
                   + nw_ref[...] * collapse(s1_ref)) * scale
        else:
            res = collapse(s0_ref) * scale
        out_ref[0] = res                        # (1, C) row for this core split


class CFPNLossPallas:
    """JAX/Pallas port of CFPN_Loss.

    assume_binary_targets=True enables the single-log fast path (exact for hard
    {0,1} labels — what CFPN actually feeds); it changes semantics for soft
    targets, so it stays off by default. Feed bf16 inputs/target for ~2x less
    HBM traffic; compute is widened to f32 inside the kernel.
    """

    def __init__(self, y, reduction="none", version="stand",
                 assume_binary_targets=False, max_tile_rows=None,
                 num_core_splits=None):
        self.reduction = reduction
        self.version = version
        self.assume_binary_targets = assume_binary_targets
        self.max_tile_rows = max_tile_rows
        self.num_core_splits = num_core_splits
        n = float(y.shape[0])
        ysum = jnp.sum(y.astype(jnp.float32), axis=0)                       # (C,)
        self.pos_weight = (n / (ysum + EPS) * 0.8).reshape(1, -1).astype(jnp.float32)
        self.neg_weight = (n / (n - ysum + EPS) * 1.0).reshape(1, -1).astype(jnp.float32)

    def _pick_tile(self, B, C, in_dtype, tgt_dtype, vmem_bytes):
        """Largest batch tile whose full working set fits the VMEM target."""
        in_item = jnp.dtype(in_dtype).itemsize
        tgt_item = jnp.dtype(tgt_dtype).itemsize
        # Per batch row: double-buffered native-dtype inputs + ~6 live f32
        # elementwise intermediates (x/t widened, logs, products).
        per_row = 2 * C * (in_item + tgt_item) + 6 * C * 4
        # Generation-aware total VMEM target (physical: v7x 64 MiB, v5e/v6e 128 MiB).
        budget = 40 * _MIB if vmem_bytes <= 64 * _MIB else 72 * _MIB
        tb = max(8, budget // per_row)
        tb -= tb % 8
        tb = max(tb, 8)
        if self.max_tile_rows is not None:
            tb = max(8, min(tb, (self.max_tile_rows // 8) * 8))
        return B if B <= tb else int(tb)

    def __call__(self, inputs, target):
        B, C = target.shape
        vmem_bytes, n_cores = _tpu_hw_params()
        tb = self._pick_tile(B, C, inputs.dtype, target.dtype, vmem_bytes)

        total_blocks = pl.cdiv(B, tb)
        n_split = self.num_core_splits if self.num_core_splits is not None else n_cores
        n_split = max(1, min(int(n_split), int(total_blocks)))
        bpc = pl.cdiv(total_blocks, n_split)            # batch tiles per core split
        clamp = (n_split * bpc) != total_blocks         # last split has pad step(s)
        needs_mask = (B % tb != 0) or clamp
        acc_rows = 8 if (tb % 8 == 0) else 1

        if clamp:
            in_idx = lambda c, g: (jnp.minimum(c * bpc + g, total_blocks - 1), 0)
        else:
            in_idx = lambda c, g: (c * bpc + g, 0)

        kernel = functools.partial(
            _cfpn_loss_kernel,
            version=self.version, batch=B, tile_rows=tb, blocks_per_core=bpc,
            acc_rows=acc_rows, binary_targets=self.assume_binary_targets,
            needs_mask=needs_mask)

        in_item = jnp.dtype(inputs.dtype).itemsize
        tgt_item = jnp.dtype(target.dtype).itemsize

        # Explicit scoped-VMEM limit sized to the real working set (+ margin).
        working_set = (2 * tb * C * (in_item + tgt_item)   # double-buffered input slabs
                       + 6 * tb * C * 4                    # f32 elementwise intermediates
                       + 2 * 2 * C * 4                     # class weights (dbuf)
                       + 2 * C * 4                         # output block
                       + 2 * acc_rows * C * 4)             # accumulators
        vmem_limit = int(max(16 * _MIB,
                             min(working_set + 6 * _MIB, (3 * vmem_bytes) // 4)))

        elems = B * C
        cost = pl.CostEstimate(
            flops=8 * elems,
            transcendentals=(elems if self.assume_binary_targets else 2 * elems),
            bytes_accessed=elems * (in_item + tgt_item) + (2 + n_split) * C * 4)

        out = pl.pallas_call(
            kernel,
            out_shape=jax.ShapeDtypeStruct((n_split, 1, C), jnp.float32),
            grid_spec=pltpu.PrefetchScalarGridSpec(
                num_scalar_prefetch=0,
                grid=(n_split, bpc),
                in_specs=[
                    pl.BlockSpec((tb, C), in_idx),             # inputs (native dtype)
                    pl.BlockSpec((tb, C), in_idx),             # target (native dtype)
                    pl.BlockSpec((1, C), lambda c, g: (0, 0)),   # pos_weight
                    pl.BlockSpec((1, C), lambda c, g: (0, 0)),   # neg_weight
                ],
                out_specs=pl.BlockSpec((1, 1, C), lambda c, g: (c, 0, 0)),
                scratch_shapes=[pltpu.VMEM((acc_rows, C), jnp.float32),
                                pltpu.VMEM((acc_rows, C), jnp.float32)],
            ),
            compiler_params=pltpu.CompilerParams(
                dimension_semantics=("parallel", "arbitrary"),
                vmem_limit_bytes=vmem_limit),
            cost_estimate=cost,
        )(inputs, target, self.pos_weight, self.neg_weight)

        loss = out.reshape(n_split, C)
        if n_split > 1:
            loss = jnp.sum(loss, axis=0, keepdims=True)   # combine per-core partials
        if self.reduction == "mean":
            return jnp.mean(loss)
        return loss


def _reference(inputs, target, pos_w, neg_w, version, reduction):
    """Pure-JAX reference mirroring the PyTorch loop."""
    x = inputs.astype(jnp.float32)
    t = target.astype(jnp.float32)
    if version == "stand":
        per = -(pos_w * t * jnp.log(x + EPS) + neg_w * (1 - t) * jnp.log(1 - x + EPS))
    elif version == "Focal_Loss":
        per = -((1 - t) * x ** 2 * jnp.log(1 - x + EPS)
                + t * (1 - x) ** 2 * jnp.log(x + EPS))
    else:
        per = -(t * jnp.log(x + EPS) + (1 - t) * jnp.log(1 - x + EPS))
    loss = jnp.sum(per, axis=0, keepdims=True) / target.shape[0]
    return jnp.mean(loss) if reduction == "mean" else loss


if __name__ == "__main__":
    key = jax.random.PRNGKey(0)
    B, C = 8, 480  # C=480 is hard-coded in the original forward

    k_y, k_in, k_tgt, k_in2, k_tgt2 = jax.random.split(key, 5)
    y = (jax.random.uniform(k_y, (B, C)) > 0.7).astype(jnp.float32)
    inputs = jax.nn.sigmoid(jax.random.normal(k_in, (B, C)))
    target = (jax.random.uniform(k_tgt, (B, C)) > 0.5).astype(jnp.float32)

    # 'stand', reduction='none'
    mod = CFPNLossPallas(y, reduction="none", version="stand")
    out = mod(inputs, target)
    jax.block_until_ready(out)
    ref = _reference(inputs, target, mod.pos_weight, mod.neg_weight, "stand", "none")
    assert out.shape == (1, C), out.shape
    assert jnp.allclose(out, ref, rtol=1e-4, atol=1e-4), "stand/none mismatch"

    # 'stand', reduction='mean'
    out_mean = CFPNLossPallas(y, reduction="mean", version="stand")(inputs, target)
    jax.block_until_ready(out_mean)
    assert jnp.allclose(out_mean, jnp.mean(ref), rtol=1e-4, atol=1e-4), "stand/mean mismatch"

    # binary-target fast path (single log per element)
    out_bin = CFPNLossPallas(y, reduction="none", version="stand",
                             assume_binary_targets=True)(inputs, target)
    jax.block_until_ready(out_bin)
    assert jnp.allclose(out_bin, ref, rtol=1e-4, atol=1e-4), "binary fast path mismatch"

    # bf16 inputs: no host-side cast, widened to f32 inside the kernel
    in_bf16 = inputs.astype(jnp.bfloat16)
    tgt_bf16 = target.astype(jnp.bfloat16)
    out_bf16 = mod(in_bf16, tgt_bf16)
    jax.block_until_ready(out_bf16)
    ref_bf16 = _reference(in_bf16, tgt_bf16, mod.pos_weight, mod.neg_weight, "stand", "none")
    assert jnp.allclose(out_bf16, ref_bf16, rtol=1e-3, atol=1e-3), "bf16 mismatch"

    # multi-tile reduction with a partial last tile (accumulator + last-step mask)
    B2 = 20
    inputs2 = jax.nn.sigmoid(jax.random.normal(k_in2, (B2, C)))
    target2 = (jax.random.uniform(k_tgt2, (B2, C)) > 0.5).astype(jnp.float32)
    mod_tiled = CFPNLossPallas(y, reduction="none", version="stand", max_tile_rows=8)
    out_tiled = mod_tiled(inputs2, target2)
    jax.block_until_ready(out_tiled)
    ref_tiled = _reference(inputs2, target2, mod_tiled.pos_weight, mod_tiled.neg_weight,
                           "stand", "none")
    assert jnp.allclose(out_tiled, ref_tiled, rtol=1e-4, atol=1e-4), "tiled mismatch"

    # forced 2-way core split (v7x megacore path; runs as a plain loop on 1-TC chips)
    mod_split = CFPNLossPallas(y, reduction="none", version="stand",
                               max_tile_rows=8, num_core_splits=2)
    out_split = mod_split(inputs2, target2)
    jax.block_until_ready(out_split)
    assert jnp.allclose(out_split, ref_tiled, rtol=1e-4, atol=1e-4), "core-split mismatch"

    # Focal_Loss and ablationLoss branches
    for ver in ("Focal_Loss", "ablationLoss"):
        m = CFPNLossPallas(y, reduction="none", version=ver)
        o = m(inputs, target)
        jax.block_until_ready(o)
        r = _reference(inputs, target, m.pos_weight, m.neg_weight, ver, "none")
        assert jnp.allclose(o, r, rtol=1e-4, atol=1e-4), f"{ver} mismatch"

    print("KERNEL_OK")
</pallas_src>

<mosaic_0001>
module attributes {stable_mosaic.version = 11 : i64} {
  func.func @_cfpn_loss_kernel(%arg0: i32, %arg1: i32, %arg2: memref<8x480xf32, #tpu.memory_space<vmem>>, %arg3: memref<8x480xf32, #tpu.memory_space<vmem>>, %arg4: memref<1x480xf32, #tpu.memory_space<vmem>>, %arg5: memref<1x480xf32, #tpu.memory_space<vmem>>, %arg6: memref<1x1x480xf32, #tpu.memory_space<vmem>>, %arg7: memref<8x480xf32, #tpu.memory_space<vmem>>, %arg8: memref<8x480xf32, #tpu.memory_space<vmem>>) attributes {dimension_semantics = [#tpu.dimension_semantics<parallel>, #tpu.dimension_semantics<arbitrary>], iteration_bounds = array<i64: 1, 1>, scalar_prefetch = 0 : i64, scratch_operands = 2 : i64, tpu.core_type = #tpu.core_type<tc>, window_params = [{transform_indices = @transform_0, window_bounds = array<i64: 8, 480>}, {transform_indices = @transform_1, window_bounds = array<i64: 8, 480>}, {pipeline_mode = #tpu.pipeline_mode<synchronous>, transform_indices = @transform_2, window_bounds = array<i64: 1, 480>}, {pipeline_mode = #tpu.pipeline_mode<synchronous>, transform_indices = @transform_3, window_bounds = array<i64: 1, 480>}, {transform_indices = @transform_4, window_bounds = array<i64: 1, 1, 480>}]} {
    %c0_i32 = arith.constant 0 : i32
    %0 = arith.cmpi eq, %arg1, %c0_i32 : i32
    %1 = arith.extui %0 : i1 to i32
    %c0_i32_0 = arith.constant 0 : i32
    %2 = arith.cmpi ne, %1, %c0_i32_0 : i32
    scf.if %2 {
      %cst_19 = arith.constant 0.000000e+00 : f32
      %30 = vector.broadcast %cst_19 : f32 to vector<8x480xf32>
      %c0_20 = arith.constant 0 : index
      %c0_21 = arith.constant 0 : index
      %31 = vector.load %arg7[%c0_20, %c0_21] : memref<8x480xf32, #tpu.memory_space<vmem>>, vector<8x480xf32>
      tpu.vector_store %arg7[%c0_20, %c0_21], %30 {strides = array<i32>} : memref<8x480xf32, #tpu.memory_space<vmem>>, vector<8x480xf32>,
      %cst_22 = arith.constant 0.000000e+00 : f32
      %32 = vector.broadcast %cst_22 : f32 to vector<8x480xf32>
      %c0_23 = arith.constant 0 : index
      %c0_24 = arith.constant 0 : index
      %33 = vector.load %arg8[%c0_23, %c0_24] : memref<8x480xf32, #tpu.memory_space<vmem>>, vector<8x480xf32>
      tpu.vector_store %arg8[%c0_23, %c0_24], %32 {strides = array<i32>} : memref<8x480xf32, #tpu.memory_space<vmem>>, vector<8x480xf32>,
    } else {
    }
    %c0 = arith.constant 0 : index
    %c0_1 = arith.constant 0 : index
    %3 = vector.load %arg2[%c0, %c0_1] : memref<8x480xf32, #tpu.memory_space<vmem>>, vector<8x480xf32>
    %c0_2 = arith.constant 0 : index
    %c0_3 = arith.constant 0 : index
    %4 = vector.load %arg3[%c0_2, %c0_3] : memref<8x480xf32, #tpu.memory_space<vmem>>, vector<8x480xf32>
    %cst = arith.constant 9.99999974E-6 : f32
    %5 = vector.broadcast %cst : f32 to vector<8x480xf32>
    %6 = arith.addf %3, %5 : vector<8x480xf32>
    %7 = math.log %6 : vector<8x480xf32>
    %8 = arith.mulf %4, %7 : vector<8x480xf32>
    %cst_4 = arith.constant 1.000000e+00 : f32
    %9 = vector.broadcast %cst_4 : f32 to vector<8x480xf32>
    %10 = arith.subf %9, %4 : vector<8x480xf32>
    %cst_5 = arith.constant 1.000000e+00 : f32
    %11 = vector.broadcast %cst_5 : f32 to vector<8x480xf32>
    %12 = arith.subf %11, %3 : vector<8x480xf32>
    %cst_6 = arith.constant 9.99999974E-6 : f32
    %13 = vector.broadcast %cst_6 : f32 to vector<8x480xf32>
    %14 = arith.addf %12, %13 : vector<8x480xf32>
    %15 = math.log %14 : vector<8x480xf32>
    %16 = arith.mulf %10, %15 : vector<8x480xf32>
    %c0_7 = arith.constant 0 : index
    %c0_8 = arith.constant 0 : index
    %17 = vector.load %arg7[%c0_7, %c0_8] : memref<8x480xf32, #tpu.memory_space<vmem>>, vector<8x480xf32>
    %18 = vector.shape_cast %8 : vector<8x480xf32> to vector<1x8x480xf32>
    %cst_9 = arith.constant dense<0.000000e+00> : vector<8x480xf32>
    %19 = vector.multi_reduction <add>, %18, %cst_9 [0] : vector<1x8x480xf32> to vector<8x480xf32>
    %20 = arith.addf %17, %19 : vector<8x480xf32>
    %c0_10 = arith.constant 0 : index
    %c0_11 = arith.constant 0 : index
    %21 = vector.load %arg7[%c0_10, %c0_11] : memref<8x480xf32, #tpu.memory_space<vmem>>, vector<8x480xf32>
    tpu.vector_store %arg7[%c0_10, %c0_11], %20 {strides = array<i32>} : memref<8x480xf32, #tpu.memory_space<vmem>>, vector<8x480xf32>,
    %c0_12 = arith.constant 0 : index
    %c0_13 = arith.constant 0 : index
    %22 = vector.load %arg8[%c0_12, %c0_13] : memref<8x480xf32, #tpu.memory_space<vmem>>, vector<8x480xf32>
    %23 = vector.shape_cast %16 : vector<8x480xf32> to vector<1x8x480xf32>
    %cst_14 = arith.constant dense<0.000000e+00> : vector<8x480xf32>
    %24 = vector.multi_reduction <add>, %23, %cst_14 [0] : vector<1x8x480xf32> to vector<8x480xf32>
    %25 = arith.addf %22, %24 : vector<8x480xf32>
    %c0_15 = arith.constant 0 : index
    %c0_16 = arith.constant 0 : index
    %26 = vector.load %arg8[%c0_15, %c0_16] : memref<8x480xf32, #tpu.memory_space<vmem>>, vector<8x480xf32>
    tpu.vector_store %arg8[%c0_15, %c0_16], %25 {strides = array<i32>} : memref<8x480xf32, #tpu.memory_space<vmem>>, vector<8x480xf32>,
    %c0_i32_17 = arith.constant 0 : i32
    %27 = arith.cmpi eq, %arg1, %c0_i32_17 : i32
    %28 = arith.extui %27 : i1 to i32
    %c0_i32_18 = arith.constant 0 : i32
    %29 = arith.cmpi ne, %28, %c0_i32_18 : i32
    scf.if %29 {
      %c0_19 = arith.constant 0 : index
      %c0_20 = arith.constant 0 : index
      %30 = vector.load %arg4[%c0_19, %c0_20] : memref<1x480xf32, #tpu.memory_space<vmem>>, vector<1x480xf32>
      %c0_21 = arith.constant 0 : index
      %c0_22 = arith.constant 0 : index
      %31 = vector.load %arg7[%c0_21, %c0_22] : memref<8x480xf32, #tpu.memory_space<vmem>>, vector<8x480xf32>
      %cst_23 = arith.constant dense<0.000000e+00> : vector<480xf32>
      %32 = vector.multi_reduction <add>, %31, %cst_23 [0] : vector<8x480xf32> to vector<480xf32>
      %33 = vector.shape_cast %32 : vector<480xf32> to vector<1x480xf32>
      %34 = arith.mulf %30, %33 : vector<1x480xf32>
      %c0_24 = arith.constant 0 : index
      %c0_25 = arith.constant 0 : index
      %35 = vector.load %arg5[%c0_24, %c0_25] : memref<1x480xf32, #tpu.memory_space<vmem>>, vector<1x480xf32>
      %c0_26 = arith.constant 0 : index
      %c0_27 = arith.constant 0 : index
      %36 = vector.load %arg8[%c0_26, %c0_27] : memref<8x480xf32, #tpu.memory_space<vmem>>, vector<8x480xf32>
      %cst_28 = arith.constant dense<0.000000e+00> : vector<480xf32>
      %37 = vector.multi_reduction <add>, %36, %cst_28 [0] : vector<8x480xf32> to vector<480xf32>
      %38 = vector.shape_cast %37 : vector<480xf32> to vector<1x480xf32>
      %39 = arith.mulf %35, %38 : vector<1x480xf32>
      %40 = arith.addf %34, %39 : vector<1x480xf32>
      %cst_29 = arith.constant -1.250000e-01 : f32
      %41 = vector.broadcast %cst_29 : f32 to vector<1x480xf32>
      %42 = arith.mulf %40, %41 : vector<1x480xf32>
      %c0_30 = arith.constant 0 : index
      %c0_31 = arith.constant 0 : index
      %c0_32 = arith.constant 0 : index
      %43 = vector.load %arg6[%c0_30, %c0_31, %c0_32] : memref<1x1x480xf32, #tpu.memory_space<vmem>>, vector<1x1x480xf32>
      %44 = vector.shape_cast %43 : vector<1x1x480xf32> to vector<1x480xf32>
      %45 = vector.shape_cast %42 : vector<1x480xf32> to vector<1x1x480xf32>
      tpu.vector_store %arg6[%c0_30, %c0_31, %c0_32], %45 {strides = array<i32>} : memref<1x1x480xf32, #tpu.memory_space<vmem>>, vector<1x1x480xf32>,
    } else {
    }
    return
  }
  func.func @transform_0(%arg0: i32, %arg1: i32) -> (i32, i32) {
    %c1_i32 = arith.constant 1 : i32
    %0 = arith.muli %arg0, %c1_i32 : i32
    %1 = arith.addi %0, %arg1 : i32
    %c0_i32 = arith.constant 0 : i32
    %c0_i32_0 = arith.constant 0 : i32
    return %1, %c0_i32 : i32, i32
  }
  func.func @transform_1(%arg0: i32, %arg1: i32) -> (i32, i32) {
    %c1_i32 = arith.constant 1 : i32
    %0 = arith.muli %arg0, %c1_i32 : i32
    %1 = arith.addi %0, %arg1 : i32
    %c0_i32 = arith.constant 0 : i32
    %c0_i32_0 = arith.constant 0 : i32
    return %1, %c0_i32 : i32, i32
  }
  func.func @transform_2(%arg0: i32, %arg1: i32) -> (i32, i32) {
    %c0_i32 = arith.constant 0 : i32
    %c0_i32_0 = arith.constant 0 : i32
    %c0_i32_1 = arith.constant 0 : i32
    return %c0_i32, %c0_i32_0 : i32, i32
  }
  func.func @transform_3(%arg0: i32, %arg1: i32) -> (i32, i32) {
    %c0_i32 = arith.constant 0 : i32
    %c0_i32_0 = arith.constant 0 : i32
    %c0_i32_1 = arith.constant 0 : i32
    return %c0_i32, %c0_i32_0 : i32, i32
  }
  func.func @transform_4(%arg0: i32, %arg1: i32) -> (i32, i32, i32) {
    %c0_i32 = arith.constant 0 : i32
    %c0_i32_0 = arith.constant 0 : i32
    %c0_i32_1 = arith.constant 0 : i32
    return %arg0, %c0_i32, %c0_i32_0 : i32, i32, i32
  }
}

</mosaic_0001>

<llo_original>
// kernel: tpu_custom_call.1
$region0: #{tpu_custom_call.1}
  #allocation0 [shape = 'u32[]', space=smem, size = 0x4, offset = 0x4, fixed_abs, tag = 'smem constant byte address 0x4 - core index']
  #allocation1 [shape = 'u32[144,128]{1,0:T(1,128)}', space=vmem, size = 0x12000, scoped, tag = 'internal scratch']
  #allocation2 [shape = 'f32[8,480]{1,0:T(8,128)}', space=vmem, size = 0x4000, scoped, tag = 'scratch operand']
  #allocation3 [shape = 'f32[8,480]{1,0:T(8,128)}', space=vmem, size = 0x4000, scoped, tag = 'scratch operand']
  %s0 = inlined_call_operand.hbm [shape: f32[8,480], index: 0, kind: input, shape index: {}]
  %s1 = inlined_call_operand.hbm [shape: f32[8,480], index: 1, kind: input, shape index: {}]
  %s2 = inlined_call_operand.vmem [shape: f32[1,480], index: 2, kind: input, shape index: {}]
  %s3 = inlined_call_operand.vmem [shape: f32[1,480], index: 3, kind: input, shape index: {}]
  %s4 = inlined_call_operand.hbm [shape: f32[1,1,480], index: 4, kind: output, shape index: {}]
  %s5 = sld [smem:[#allocation0]]
  $region42: #{tpu_custom_call.1} parent=0
    _
  %s7 = ssub.s32 1, %s5
  %s8 = scalar_select 0, %s7, %s5
  $region1: #{tpu_custom_call.1} parent=0
    #allocation4 [shape = 'u8[16384]{0}', space=vmem, size = 0x4000, scoped, tag = 'input window, operand 0, single buffered']
    #allocation5 [shape = 's32[1]{0}', space=sflag, size = 0x4, scoped, tag = 'scoped memory for tpu_custom_call.1']
    #allocation6 [shape = 's32[1]{0}', space=sflag, size = 0x4, scoped, tag = 'scoped memory for tpu_custom_call.1']
    #allocation7 [shape = 'u8[16384]{0}', space=vmem, size = 0x4000, scoped, tag = 'input window, operand 1, single buffered']
    #allocation8 [shape = 's32[1]{0}', space=sflag, size = 0x4, scoped, tag = 'scoped memory for tpu_custom_call.1']
    #allocation9 [shape = 'u8[2048]{0}', space=vmem, size = 0x800, scoped, tag = 'output window, operand 0, single buffered']
    %9 = vsyncpa [#allocation5], 0
    %10 = vsyncpa [#allocation8], 0
    %11 = vsyncpa [#allocation6], 0
    // Predicated region
    $region2: #{tpu_custom_call.1} parent=1 // pred_check
      _
    $region3: #{tpu_custom_call.1} parent=1 // pred_check_branch
      %13 = sbr.rel (0) target = $region5
    $region4: #{tpu_custom_call.1} parent=1 // pred_region
      %s14 = sadd.s32 0, 0
      %s16 = ssub.s32 512, 512
      %17 = vsyncadd [#allocation5], %s16
      %s18 = smul.addr %s14, 4
      %s19 = smul.addr %s18, 128
      %s20 = scalar_lea.hbm %s0, %s19
      %s22 = sshll.u32 [#allocation4], 4
      %s23 = int_to_ptr.vmem [resolvable:$true] %s22
      %25 = dma.hbm_to_vmem [thread:$0]  %s20, 512, %s23, [#allocation5]
    $region5: #{tpu_custom_call.1} parent=1 // pred_fallthru
      _
    // Predicated region
    $region6: #{tpu_custom_call.1} parent=1 // pred_check
      _
    $region7: #{tpu_custom_call.1} parent=1 // pred_check_branch
      %27 = sbr.rel (0) target = $region9
    $region8: #{tpu_custom_call.1} parent=1 // pred_region
      %s28 = sadd.s32 0, 0
      %s30 = ssub.s32 512, 512
      %31 = vsyncadd [#allocation8], %s30
      %s32 = smul.addr %s28, 4
      %s33 = smul.addr %s32, 128
      %s34 = scalar_lea.hbm %s1, %s33
      %s36 = sshll.u32 [#allocation7], 4
      %s37 = int_to_ptr.vmem [resolvable:$true] %s36
      %39 = dma.hbm_to_vmem [thread:$0]  %s34, 512, %s37, [#allocation8]
    $region9: #{tpu_custom_call.1} parent=1 // pred_fallthru
      _
    // Predicated region
    $region10: #{tpu_custom_call.1} parent=1 // pred_check
      _
    $region11: #{tpu_custom_call.1} parent=1 // pred_check_branch
      %41 = sbr.rel (0) target = $region13
    $region12: #{tpu_custom_call.1} parent=1 // pred_region
      _
    $region13: #{tpu_custom_call.1} parent=1 // pred_fallthru
      _
    // Predicated region
    $region14: #{tpu_custom_call.1} parent=1 // pred_check
      _
    $region15: #{tpu_custom_call.1} parent=1 // pred_check_branch
      %43 = sbr.rel (0) target = $region17
    $region16: #{tpu_custom_call.1} parent=1 // pred_region
      _
    $region17: #{tpu_custom_call.1} parent=1 // pred_fallthru
      _
    // Predicated region
    $region18: #{tpu_custom_call.1} parent=1 // pred_check
      _
    $region19: #{tpu_custom_call.1} parent=1 // pred_check_branch
      %45 = sbr.rel (0) target = $region21
    $region20: #{tpu_custom_call.1} parent=1 // pred_region
      %46 = dma.done [#allocation5], 512
    $region21: #{tpu_custom_call.1} parent=1 // pred_fallthru
      _
    // Predicated region
    $region22: #{tpu_custom_call.1} parent=1 // pred_check
      _
    $region23: #{tpu_custom_call.1} parent=1 // pred_check_branch
      %48 = sbr.rel (0) target = $region25
    $region24: #{tpu_custom_call.1} parent=1 // pred_region
      %49 = dma.done [#allocation8], 512
    $region25: #{tpu_custom_call.1} parent=1 // pred_fallthru
      _
    %s50 = sadd.s32 0, 0
    %s51 = sadd.s32 0, 0
    %p52 = scmp.eq.s32.totalorder 0, 0
    // Predicated region
    $region26: #{tpu_custom_call.1} parent=1 // pred_check
      %p53 = pneg %p52
    $region27: #{tpu_custom_call.1} parent=1 // pred_check_branch
      %55 = sbr.rel (%p53) target = $region29
    $region28: #{tpu_custom_call.1} parent=1 // pred_region
      %56 = vst [vmem:[#allocation2] sm:$0xff] 0.0
      %57 = vst [vmem:[#allocation2 + $0x8] sm:$0xff] 0.0
      %58 = vst [vmem:[#allocation2 + $0x10] sm:$0xff] 0.0
      %vm59 = vcmask 785408
      %60 = vst.msk [vmem:[#allocation2 + $0x18] sm:$0xff] %vm59, 0.0
      %61 = vst [vmem:[#allocation3] sm:$0xff] 0.0
      %62 = vst [vmem:[#allocation3 + $0x8] sm:$0xff] 0.0
      %63 = vst [vmem:[#allocation3 + $0x10] sm:$0xff] 0.0
      %64 = vst.msk [vmem:[#allocation3 + $0x18] sm:$0xff] %vm59, 0.0
    $region29: #{tpu_custom_call.1} parent=1 // pred_fallthru
      _
    %v65 = vld [vmem:[#allocation4] sm:$0xff]
    %v66 = vld [vmem:[#allocation4 + $0x8] sm:$0xff]
    %v67 = vld [vmem:[#allocation4 + $0x10] sm:$0xff]
    %v68 = vld [vmem:[#allocation4 + $0x18] sm:$0xff]
    %v69 = vld [vmem:[#allocation7] sm:$0xff]
    %v70 = vld [vmem:[#allocation7 + $0x8] sm:$0xff]
    %v71 = vld [vmem:[#allocation7 + $0x10] sm:$0xff]
    %v72 = vld [vmem:[#allocation7 + $0x18] sm:$0xff]
    %v73 = vadd.f32 %v65, 1e-05
    %v74 = vadd.f32 %v66, 1e-05
    %v75 = vadd.f32 %v67, 1e-05
    %v76 = vadd.f32 %v68, 1e-05
    %v77 = vlog2.pop %v73
    %v78 = vmul.f32 %v77, 0.6931472
    %v79 = vlog2.pop %v74
    %v80 = vmul.f32 %v79, 0.6931472
    %v81 = vlog2.pop %v75
    %v82 = vmul.f32 %v81, 0.6931472
    %v83 = vlog2.pop %v76
    %v84 = vmul.f32 %v83, 0.6931472
    %v85 = vmul.f32 %v69, %v78
    %v86 = vmul.f32 %v70, %v80
    %v87 = vmul.f32 %v71, %v82
    %v88 = vmul.f32 %v72, %v84
    %v89 = vsub.f32 1.0, %v69
    %v90 = vsub.f32 1.0, %v70
    %v91 = vsub.f32 1.0, %v71
    %v92 = vsub.f32 1.0, %v72
    %v93 = vsub.f32 1.0, %v65
    %v94 = vsub.f32 1.0, %v66
    %v95 = vsub.f32 1.0, %v67
    %v96 = vsub.f32 1.0, %v68
    %v97 = vadd.f32 %v93, 1e-05
    %v98 = vadd.f32 %v94, 1e-05
    %v99 = vadd.f32 %v95, 1e-05
    %v100 = vadd.f32 %v96, 1e-05
    %v101 = vlog2.pop %v97
    %v102 = vmul.f32 %v101, 0.6931472
    %v103 = vlog2.pop %v98
    %v104 = vmul.f32 %v103, 0.6931472
    %v105 = vlog2.pop %v99
    %v106 = vmul.f32 %v105, 0.6931472
    %v107 = vlog2.pop %v100
    %v108 = vmul.f32 %v107, 0.6931472
    %v109 = vmul.f32 %v89, %v102
    %v110 = vmul.f32 %v90, %v104
    %v111 = vmul.f32 %v91, %v106
    %v112 = vmul.f32 %v92, %v108
    %v113 = vld [vmem:[#allocation2] sm:$0xff]
    %v114 = vld [vmem:[#allocation2 + $0x8] sm:$0xff]
    %v115 = vld [vmem:[#allocation2 + $0x10] sm:$0xff]
    %v116 = vld [vmem:[#allocation2 + $0x18] sm:$0xff]
    %v117 = vadd.f32 %v85, 0.0
    %v118 = vadd.f32 %v86, 0.0
    %v119 = vadd.f32 %v87, 0.0
    %v120 = vadd.f32 %v88, 0.0
    %v121 = vadd.f32 %v113, %v117
    %v122 = vadd.f32 %v114, %v118
    %v123 = vadd.f32 %v115, %v119
    %v124 = vadd.f32 %v116, %v120
    %125 = vst [vmem:[#allocation2] sm:$0xff] %v121
    %126 = vst [vmem:[#allocation2 + $0x8] sm:$0xff] %v122
    %127 = vst [vmem:[#allocation2 + $0x10] sm:$0xff] %v123
    %vm128 = vcmask 785408
    %129 = vst.msk [vmem:[#allocation2 + $0x18] sm:$0xff] %vm128, %v124
    %v130 = vld [vmem:[#allocation3] sm:$0xff]
    %v131 = vld [vmem:[#allocation3 + $0x8] sm:$0xff]
    %v132 = vld [vmem:[#allocation3 + $0x10] sm:$0xff]
    %v133 = vld [vmem:[#allocation3 + $0x18] sm:$0xff]
    %v134 = vadd.f32 %v109, 0.0
    %v135 = vadd.f32 %v110, 0.0
    %v136 = vadd.f32 %v111, 0.0
    %v137 = vadd.f32 %v112, 0.0
    %v138 = vadd.f32 %v130, %v134
    %v139 = vadd.f32 %v131, %v135
    %v140 = vadd.f32 %v132, %v136
    %v141 = vadd.f32 %v133, %v137
    %142 = vst [vmem:[#allocation3] sm:$0xff] %v138
    %143 = vst [vmem:[#allocation3 + $0x8] sm:$0xff] %v139
    %144 = vst [vmem:[#allocation3 + $0x10] sm:$0xff] %v140
    %145 = vst.msk [vmem:[#allocation3 + $0x18] sm:$0xff] %vm128, %v141
    // Predicated region
    $region30: #{tpu_custom_call.1} parent=1 // pred_check
      %p146 = pneg %p52
    $region31: #{tpu_custom_call.1} parent=1 // pred_check_branch
      %148 = sbr.rel (%p146) target = $region33
    $region32: #{tpu_custom_call.1} parent=1 // pred_region
      %v149 = vld [vmem:[%s2] sm:$0xf]
      %v150 = vld [vmem:[#allocation2] sm:$0xff]
      %v151 = vld [vmem:[#allocation2 + $0x8] sm:$0xff]
      %v152 = vld [vmem:[#allocation2 + $0x10] sm:$0xff]
      %v153 = vld [vmem:[#allocation2 + $0x18] sm:$0xff]
      %v154 = vrot.slane %v150, 4
      %v155 = vadd.f32 %v150, %v154
      %v156 = vrot.slane %v155, 2
      %v157 = vadd.f32 %v155, %v156
      %v158 = vrot.slane %v157, 1
      %v159 = vadd.f32 %v157, %v158
      %v160 = vrot.slane %v151, 4
      %v161 = vadd.f32 %v151, %v160
      %v162 = vrot.slane %v161, 2
      %v163 = vadd.f32 %v161, %v162
      %v164 = vrot.slane %v163, 1
      %v165 = vadd.f32 %v163, %v164
      %v166 = vrot.slane %v152, 4
      %v167 = vadd.f32 %v152, %v166
      %v168 = vrot.slane %v167, 2
      %v169 = vadd.f32 %v167, %v168
      %v170 = vrot.slane %v169, 1
      %v171 = vadd.f32 %v169, %v170
      %v172 = vsel %vm128, %v153, 0.0
      %v173 = vrot.slane %v172, 4
      %v174 = vadd.f32 %v172, %v173
      %v175 = vrot.slane %v174, 2
      %v176 = vadd.f32 %v174, %v175
      %v177 = vrot.slane %v176, 1
      %v178 = vadd.f32 %v176, %v177
      %v183 = vcombine.low %v159, %v165
      %v184 = vcombine.low %v171, %v178
      %v186 = vunpack.c.l.s4 1966171168
      %v187 = vunpack.c.0.s8 %v186
      %v188 = vlaneseq
      %v189 = vshrl.u32 %v188, 7
      %v190 = vsub.s32 %v187, %v189
      %v191 = vrot.slane %v183, %v190
      %v193 = vunpack.c.l.s4 1966171168
      %v194 = vunpack.c.0.s8 %v193
      %v195 = vlaneseq
      %v196 = vshrl.u32 %v195, 7
      %v197 = vsub.s32 %v194, %v196
      %v198 = vrot.slane %v184, %v197
      %v199 = vcombine.low %v191, %v198
      %v201 = vunpack.c.l.s4 1966171168
      %v202 = vunpack.c.0.s8 %v201
      %v203 = vlaneseq
      %v204 = vshrl.u32 %v203, 7
      %v205 = vsub.s32 %v202, %v204
      %v206 = vrot.slane %v199, %v205
      %v208 = vmul.f32 %v149, %v206
      %v209 = vld [vmem:[%s3] sm:$0xf]
      %v210 = vld [vmem:[#allocation3] sm:$0xff]
      %v211 = vld [vmem:[#allocation3 + $0x8] sm:$0xff]
      %v212 = vld [vmem:[#allocation3 + $0x10] sm:$0xff]
      %v213 = vld [vmem:[#allocation3 + $0x18] sm:$0xff]
      %v214 = vrot.slane %v210, 4
      %v215 = vadd.f32 %v210, %v214
      %v216 = vrot.slane %v215, 2
      %v217 = vadd.f32 %v215, %v216
      %v218 = vrot.slane %v217, 1
      %v219 = vadd.f32 %v217, %v218
      %v220 = vrot.slane %v211, 4
      %v221 = vadd.f32 %v211, %v220
      %v222 = vrot.slane %v221, 2
      %v223 = vadd.f32 %v221, %v222
      %v224 = vrot.slane %v223, 1
      %v225 = vadd.f32 %v223, %v224
      %v226 = vrot.slane %v212, 4
      %v227 = vadd.f32 %v212, %v226
      %v228 = vrot.slane %v227, 2
      %v229 = vadd.f32 %v227, %v228
      %v230 = vrot.slane %v229, 1
      %v231 = vadd.f32 %v229, %v230
      %v232 = vsel %vm128, %v213, 0.0
      %v233 = vrot.slane %v232, 4
      %v234 = vadd.f32 %v232, %v233
      %v235 = vrot.slane %v234, 2
      %v236 = vadd.f32 %v234, %v235
      %v237 = vrot.slane %v236, 1
      %v238 = vadd.f32 %v236, %v237
      %v243 = vcombine.low %v219, %v225
      %v244 = vcombine.low %v231, %v238
      %v246 = vunpack.c.l.s4 1966171168
      %v247 = vunpack.c.0.s8 %v246
      %v248 = vlaneseq
      %v249 = vshrl.u32 %v248, 7
      %v250 = vsub.s32 %v247, %v249
      %v251 = vrot.slane %v243, %v250
      %v253 = vunpack.c.l.s4 1966171168
      %v254 = vunpack.c.0.s8 %v253
      %v255 = vlaneseq
      %v256 = vshrl.u32 %v255, 7
      %v257 = vsub.s32 %v254, %v256
      %v258 = vrot.slane %v244, %v257
      %v259 = vcombine.low %v251, %v258
      %v261 = vunpack.c.l.s4 1966171168
      %v262 = vunpack.c.0.s8 %v261
      %v263 = vlaneseq
      %v264 = vshrl.u32 %v263, 7
      %v265 = vsub.s32 %v262, %v264
      %v266 = vrot.slane %v259, %v265
      %v268 = vmul.f32 %v209, %v266
      %v269 = vadd.f32 %v208, %v268
      %v270 = vmul.f32 %v269, -0.125
      %v271 = vlaneseq
      %vm272 = vcmp.ge.s32.totalorder %v271, 0
      %vm273 = vcmp.lt.s32.totalorder %v271, 480
      %vm274 = vmand %vm272, %vm273
      %275 = vst.msk [vmem:[#allocation9] sm:$0xf] %vm274, %v270
    $region33: #{tpu_custom_call.1} parent=1 // pred_fallthru
      _
    // Predicated region
    $region34: #{tpu_custom_call.1} parent=1 // pred_check
      _
    $region35: #{tpu_custom_call.1} parent=1 // pred_check_branch
      %277 = sbr.rel (0) target = $region37
    $region36: #{tpu_custom_call.1} parent=1 // pred_region
      %s279 = ssub.s32 64, 64
      %280 = vsyncadd [#allocation6], %s279
      %s282 = sshll.u32 [#allocation9], 4
      %s283 = int_to_ptr.vmem [resolvable:$true] %s282
      %285 = dma.vmem_to_hbm [thread:$0]  %s283, 64, %s4, [#allocation6]
    $region37: #{tpu_custom_call.1} parent=1 // pred_fallthru
      _
    // Predicated region
    $region38: #{tpu_custom_call.1} parent=1 // pred_check
      _
    $region39: #{tpu_custom_call.1} parent=1 // pred_check_branch
      %287 = sbr.rel (0) target = $region41
    $region40: #{tpu_custom_call.1} parent=1 // pred_region
      %288 = dma.done [#allocation6], 64
    $region41: #{tpu_custom_call.1} parent=1 // pred_fallthru
      _
    %289 = vsyncpa [#allocation5], 1
    %290 = vsyncpa [#allocation8], 1
    %291 = vsyncpa [#allocation6], 1

</llo_original>
